<compile_context>
chip_gen: v7x
topology: tpu7x:2x2x1
jax: 0.10.0
libtpu: 0.0.40
codegen_flags: <defaults>
</compile_context>

<pallas_src>
import functools

import jax
import jax.numpy as jnp
from jax import lax
from jax.experimental import pallas as pl
from jax.experimental.pallas import tpu as pltpu

_D_PAD = 8           # dim_states (5) zero-padded to one sublane group
_HID_PAD = 128       # hidden (100) zero-padded to one full lane width / MXU depth
_ACT_PAD = 8         # n_actions (3) zero-padded to one sublane group
_DEFAULT_BLOCK_B = 65536


def _round_up(n, m):
    return ((n + m - 1) // m) * m


def _tile_plan(batch, block_b):
    """Pick (tb, b_pad): tb multiple of 128 lanes; >=2 grid steps when possible."""
    b128 = _round_up(max(int(batch), 1), 128)
    steps = pl.cdiv(b128, block_b)
    if b128 >= 256:
        steps = max(steps, 2)          # keep v7x's second TensorCore busy
    tb = _round_up(pl.cdiv(b128, steps), 128)
    return tb, tb * steps


def _policy_kernel(xT_ref, w1_ref, b1_ref, w2_ref, b2_ref, o_ref, *, n_actions):
    xT = xT_ref[...]                                          # (8, tb) f32, rows >= D are 0

    # ---- Layer 1 on the MXU: (128, 8) @ (8, tb); padded rows/cols are zero, tanh(0)=0.
    h = jnp.tanh(
        jnp.dot(w1_ref[...], xT, preferred_element_type=jnp.float32) + b1_ref[...])

    # ---- Layer 2 on the MXU: (8, 128) @ (128, tb) -> (8, tb) logits^T.
    logits = jnp.dot(w2_ref[...], h, preferred_element_type=jnp.float32) + b2_ref[...]

    # Mask padded action sublanes so softmax ignores them (exp(-inf) = 0).
    row = lax.broadcasted_iota(jnp.int32, logits.shape, 0)
    logits = jnp.where(row < n_actions, logits, -jnp.inf)

    # ---- Stable softmax over the action sublanes; exact divide (rows sum to ~1 exactly).
    m = jnp.max(logits, axis=0, keepdims=True)
    e = jnp.exp(logits - m)
    denom = jnp.sum(e, axis=0, keepdims=True)
    o_ref[...] = (e / denom).astype(o_ref.dtype)


def prepare_params(w1, b1, w2, b2):
    """Zero-pad PyTorch-layout params for the transposed kernel.

    w1: (hidden, dim_states) = nn.Linear(dim_states, hidden).weight
    b1: (hidden,)
    w2: (n_actions, hidden) = nn.Linear(hidden, n_actions).weight
    b2: (n_actions,)
    Call once and reuse; this is hoisted out of the per-call path on purpose.
    """
    h, d = w1.shape
    a, _ = w2.shape
    w1p = jnp.zeros((_HID_PAD, _D_PAD), jnp.float32).at[:h, :d].set(w1.astype(jnp.float32))
    b1p = jnp.zeros((_HID_PAD, 1), jnp.float32).at[:h, 0].set(b1.astype(jnp.float32))
    w2p = jnp.zeros((_ACT_PAD, _HID_PAD), jnp.float32).at[:a, :h].set(w2.astype(jnp.float32))
    b2p = jnp.zeros((_ACT_PAD, 1), jnp.float32).at[:a, 0].set(b2.astype(jnp.float32))
    return w1p, b1p, w2p, b2p, int(a)


def real_policy_forward(x, params, *, block_b=_DEFAULT_BLOCK_B):
    """x: (B, dim_states) f32; params = prepare_params(...). Returns (B, n_actions) probs."""
    w1p, b1p, w2p, b2p, n_actions = params
    B, D = x.shape
    tb, b_pad = _tile_plan(B, block_b)

    # One fused pad + transpose: batch goes to lanes, dim_states to (zero-padded) sublanes.
    xT = jnp.zeros((_D_PAD, b_pad), jnp.float32).at[:D, :B].set(x.astype(jnp.float32).T)

    kernel = functools.partial(_policy_kernel, n_actions=n_actions)

    out = pl.pallas_call(
        kernel,
        out_shape=jax.ShapeDtypeStruct((_ACT_PAD, b_pad), jnp.float32),
        grid=(b_pad // tb,),
        in_specs=[
            pl.BlockSpec((_D_PAD, tb), lambda i: (0, i)),          # x^T: batch-tiled (lanes)
            pl.BlockSpec((_HID_PAD, _D_PAD), lambda i: (0, 0)),    # W1: VMEM-resident
            pl.BlockSpec((_HID_PAD, 1), lambda i: (0, 0)),         # b1: VMEM-resident
            pl.BlockSpec((_ACT_PAD, _HID_PAD), lambda i: (0, 0)),  # W2: VMEM-resident
            pl.BlockSpec((_ACT_PAD, 1), lambda i: (0, 0)),         # b2: VMEM-resident
        ],
        out_specs=pl.BlockSpec((_ACT_PAD, tb), lambda i: (0, i)),  # lane-dense, lean output
        compiler_params=pltpu.CompilerParams(
            dimension_semantics=("parallel",)),
    )(xT, w1p, b1p, w2p, b2p)

    return out[:n_actions, :B].T


def _reference(x, w1, b1, w2, b2):
    h = jnp.tanh(x @ w1.T + b1)
    logits = h @ w2.T + b2
    return jax.nn.softmax(logits, axis=-1)


if __name__ == "__main__":
    key = jax.random.PRNGKey(0)
    kx, k1, k2, kb1, kb2 = jax.random.split(key, 5)

    B, dim_states, hidden, n_actions = 8, 5, 100, 3
    x = jax.random.normal(kx, (B, dim_states), dtype=jnp.float32)

    # PyTorch layout: Linear.weight is (out, in). The module re-inits weights ~ N(0, 1);
    # biases keep the default (small uniform) init.
    w1 = jax.random.normal(k1, (hidden, dim_states), dtype=jnp.float32)
    b1 = jax.random.uniform(kb1, (hidden,), jnp.float32, -1.0, 1.0) / jnp.sqrt(dim_states)
    w2 = jax.random.normal(k2, (n_actions, hidden), dtype=jnp.float32)
    b2 = jax.random.uniform(kb2, (n_actions,), jnp.float32, -1.0, 1.0) / jnp.sqrt(hidden)

    params = prepare_params(w1, b1, w2, b2)          # hoisted out of the per-call path
    out = real_policy_forward(x, params)
    out = jax.block_until_ready(out)

    ref = _reference(x, w1, b1, w2, b2)
    assert out.shape == (B, n_actions)
    assert jnp.allclose(out, ref, atol=2e-3, rtol=2e-3), "mismatch vs reference"
    assert jnp.allclose(jnp.sum(out, axis=-1), 1.0, atol=1e-5), "softmax rows must sum to 1"

    print("KERNEL_OK")
</pallas_src>

<mosaic_0001>
module attributes {stable_mosaic.version = 11 : i64} {
  func.func @_policy_kernel(%arg0: i32, %arg1: memref<8x128xf32, #tpu.memory_space<vmem>>, %arg2: memref<128x8xf32, #tpu.memory_space<vmem>>, %arg3: memref<128x1xf32, #tpu.memory_space<vmem>>, %arg4: memref<8x128xf32, #tpu.memory_space<vmem>>, %arg5: memref<8x1xf32, #tpu.memory_space<vmem>>, %arg6: memref<8x128xf32, #tpu.memory_space<vmem>>) attributes {dimension_semantics = [#tpu.dimension_semantics<parallel>], iteration_bounds = array<i64: 1>, scalar_prefetch = 0 : i64, scratch_operands = 0 : i64, tpu.core_type = #tpu.core_type<tc>, window_params = [{transform_indices = @transform_0, window_bounds = array<i64: 8, 128>}, {pipeline_mode = #tpu.pipeline_mode<synchronous>, transform_indices = @transform_1, window_bounds = array<i64: 128, 8>}, {pipeline_mode = #tpu.pipeline_mode<synchronous>, transform_indices = @transform_2, window_bounds = array<i64: 128, 1>}, {pipeline_mode = #tpu.pipeline_mode<synchronous>, transform_indices = @transform_3, window_bounds = array<i64: 8, 128>}, {pipeline_mode = #tpu.pipeline_mode<synchronous>, transform_indices = @transform_4, window_bounds = array<i64: 8, 1>}, {transform_indices = @transform_5, window_bounds = array<i64: 8, 128>}]} {
    %c0 = arith.constant 0 : index
    %c0_0 = arith.constant 0 : index
    %0 = vector.load %arg1[%c0, %c0_0] : memref<8x128xf32, #tpu.memory_space<vmem>>, vector<8x128xf32>
    %c0_1 = arith.constant 0 : index
    %c0_2 = arith.constant 0 : index
    %1 = vector.load %arg2[%c0_1, %c0_2] : memref<128x8xf32, #tpu.memory_space<vmem>>, vector<128x8xf32>
    %cst = arith.constant dense<0.000000e+00> : vector<128x128xf32>
    %2 = tpu.matmul %1, %0, %cst {dimension_numbers = #tpu.dot_dimension_numbers<[1], [0], [0], [1], [0, 0, 1, 1], [], []>} : vector<128x8xf32>, vector<8x128xf32>, vector<128x128xf32> -> vector<128x128xf32>
    %c0_3 = arith.constant 0 : index
    %c0_4 = arith.constant 0 : index
    %3 = vector.load %arg3[%c0_3, %c0_4] : memref<128x1xf32, #tpu.memory_space<vmem>>, vector<128x1xf32>
    %4 = vector.broadcast %3 : vector<128x1xf32> to vector<128x128xf32>
    %5 = arith.addf %2, %4 : vector<128x128xf32>
    %6 = math.tanh %5 : vector<128x128xf32>
    %c0_5 = arith.constant 0 : index
    %c0_6 = arith.constant 0 : index
    %7 = vector.load %arg4[%c0_5, %c0_6] : memref<8x128xf32, #tpu.memory_space<vmem>>, vector<8x128xf32>
    %cst_7 = arith.constant dense<0.000000e+00> : vector<8x128xf32>
    %8 = tpu.matmul %7, %6, %cst_7 {dimension_numbers = #tpu.dot_dimension_numbers<[1], [0], [0], [1], [0, 0, 1, 1], [], []>} : vector<8x128xf32>, vector<128x128xf32>, vector<8x128xf32> -> vector<8x128xf32>
    %c0_8 = arith.constant 0 : index
    %c0_9 = arith.constant 0 : index
    %9 = vector.load %arg5[%c0_8, %c0_9] : memref<8x1xf32, #tpu.memory_space<vmem>>, vector<8x1xf32>
    %10 = vector.broadcast %9 : vector<8x1xf32> to vector<8x128xf32>
    %11 = arith.addf %8, %10 : vector<8x128xf32>
    %12 = tpu.iota {dimensions = array<i32: 0>} : vector<8x128xi32>
    %c3_i32 = arith.constant 3 : i32
    %13 = vector.broadcast %c3_i32 : i32 to vector<8x128xi32>
    %14 = arith.cmpi slt, %12, %13 : vector<8x128xi32>
    %cst_10 = arith.constant 0xFF800000 : f32
    %15 = vector.broadcast %cst_10 : f32 to vector<8x128xf32>
    %16 = arith.select %14, %11, %15 : vector<8x128xi1>, vector<8x128xf32>
    %cst_11 = arith.constant dense<0xFF800000> : vector<128xf32>
    %17 = vector.multi_reduction <maximumf>, %16, %cst_11 [0] : vector<8x128xf32> to vector<128xf32>
    %18 = vector.shape_cast %17 : vector<128xf32> to vector<1x128xf32>
    %19 = vector.broadcast %18 : vector<1x128xf32> to vector<8x128xf32>
    %20 = arith.subf %16, %19 : vector<8x128xf32>
    %21 = math.exp %20 : vector<8x128xf32>
    %cst_12 = arith.constant dense<0.000000e+00> : vector<128xf32>
    %22 = vector.multi_reduction <add>, %21, %cst_12 [0] : vector<8x128xf32> to vector<128xf32>
    %23 = vector.shape_cast %22 : vector<128xf32> to vector<1x128xf32>
    %24 = vector.broadcast %23 : vector<1x128xf32> to vector<8x128xf32>
    %25 = arith.divf %21, %24 : vector<8x128xf32>
    %c0_13 = arith.constant 0 : index
    %c0_14 = arith.constant 0 : index
    %26 = vector.load %arg6[%c0_13, %c0_14] : memref<8x128xf32, #tpu.memory_space<vmem>>, vector<8x128xf32>
    tpu.vector_store %arg6[%c0_13, %c0_14], %25 {strides = array<i32>} : memref<8x128xf32, #tpu.memory_space<vmem>>, vector<8x128xf32>,
    return
  }
  func.func @transform_0(%arg0: i32) -> (i32, i32) {
    %c0_i32 = arith.constant 0 : i32
    %c0_i32_0 = arith.constant 0 : i32
    return %c0_i32, %arg0 : i32, i32
  }
  func.func @transform_1(%arg0: i32) -> (i32, i32) {
    %c0_i32 = arith.constant 0 : i32
    %c0_i32_0 = arith.constant 0 : i32
    %c0_i32_1 = arith.constant 0 : i32
    return %c0_i32, %c0_i32_0 : i32, i32
  }
  func.func @transform_2(%arg0: i32) -> (i32, i32) {
    %c0_i32 = arith.constant 0 : i32
    %c0_i32_0 = arith.constant 0 : i32
    %c0_i32_1 = arith.constant 0 : i32
    return %c0_i32, %c0_i32_0 : i32, i32
  }
  func.func @transform_3(%arg0: i32) -> (i32, i32) {
    %c0_i32 = arith.constant 0 : i32
    %c0_i32_0 = arith.constant 0 : i32
    %c0_i32_1 = arith.constant 0 : i32
    return %c0_i32, %c0_i32_0 : i32, i32
  }
  func.func @transform_4(%arg0: i32) -> (i32, i32) {
    %c0_i32 = arith.constant 0 : i32
    %c0_i32_0 = arith.constant 0 : i32
    %c0_i32_1 = arith.constant 0 : i32
    return %c0_i32, %c0_i32_0 : i32, i32
  }
  func.func @transform_5(%arg0: i32) -> (i32, i32) {
    %c0_i32 = arith.constant 0 : i32
    %c0_i32_0 = arith.constant 0 : i32
    return %c0_i32, %arg0 : i32, i32
  }
}

</mosaic_0001>

<llo_original>
// kernel: tpu_custom_call.1
$region0: #{tpu_custom_call.1}
  #allocation0 [shape = 'u32[]', space=smem, size = 0x4, offset = 0x4, fixed_abs, tag = 'smem constant byte address 0x4 - core index']
  #allocation1 [shape = 'u32[144,128]{1,0:T(1,128)}', space=vmem, size = 0x12000, scoped, tag = 'internal scratch']
  %s0 = inlined_call_operand.vmem [shape: f32[8,128], index: 0, kind: input, shape index: {}]
  %s1 = inlined_call_operand.vmem [shape: f32[128,8], index: 1, kind: input, shape index: {}]
  %s2 = inlined_call_operand.vmem [shape: f32[128,1], index: 2, kind: input, shape index: {}]
  %s3 = inlined_call_operand.vmem [shape: f32[8,128], index: 3, kind: input, shape index: {}]
  %s4 = inlined_call_operand.vmem [shape: f32[8,1], index: 4, kind: input, shape index: {}]
  %s5 = inlined_call_operand.hbm [shape: f32[8,128], index: 5, kind: output, shape index: {}]
  %s6 = sld [smem:[#allocation0]]
  $region30: #{tpu_custom_call.1} parent=0
    _
  %s8 = ssub.s32 1, %s6
  %s9 = scalar_select 0, %s8, %s6
  $region1: #{tpu_custom_call.1} parent=0
    #allocation2 [shape = 'u8[4096]{0}', space=vmem, size = 0x1000, scoped, tag = 'output window, operand 0, single buffered']
    #allocation3 [shape = 's32[1]{0}', space=sflag, size = 0x4, scoped, tag = 'scoped memory for tpu_custom_call.1']
    %10 = vsyncpa [#allocation3], 0
    // Predicated region
    $region2: #{tpu_custom_call.1} parent=1 // pred_check
      _
    $region3: #{tpu_custom_call.1} parent=1 // pred_check_branch
      %12 = sbr.rel (0) target = $region5
    $region4: #{tpu_custom_call.1} parent=1 // pred_region
      _
    $region5: #{tpu_custom_call.1} parent=1 // pred_fallthru
      _
    // Predicated region
    $region6: #{tpu_custom_call.1} parent=1 // pred_check
      _
    $region7: #{tpu_custom_call.1} parent=1 // pred_check_branch
      %14 = sbr.rel (0) target = $region9
    $region8: #{tpu_custom_call.1} parent=1 // pred_region
      _
    $region9: #{tpu_custom_call.1} parent=1 // pred_fallthru
      _
    // Predicated region
    $region10: #{tpu_custom_call.1} parent=1 // pred_check
      _
    $region11: #{tpu_custom_call.1} parent=1 // pred_check_branch
      %16 = sbr.rel (0) target = $region13
    $region12: #{tpu_custom_call.1} parent=1 // pred_region
      _
    $region13: #{tpu_custom_call.1} parent=1 // pred_fallthru
      _
    // Predicated region
    $region14: #{tpu_custom_call.1} parent=1 // pred_check
      _
    $region15: #{tpu_custom_call.1} parent=1 // pred_check_branch
      %18 = sbr.rel (0) target = $region17
    $region16: #{tpu_custom_call.1} parent=1 // pred_region
      _
    $region17: #{tpu_custom_call.1} parent=1 // pred_fallthru
      _
    // Predicated region
    $region18: #{tpu_custom_call.1} parent=1 // pred_check
      _
    $region19: #{tpu_custom_call.1} parent=1 // pred_check_branch
      %20 = sbr.rel (0) target = $region21
    $region20: #{tpu_custom_call.1} parent=1 // pred_region
      _
    $region21: #{tpu_custom_call.1} parent=1 // pred_fallthru
      _
    %v21 = vld [vmem:[%s0] sm:$0xff]
    %v22 = vld [vmem:[%s1] sm:$0xff]
    %v23 = vld [vmem:[%s1 + $0x8] sm:$0xff]
    %v24 = vld [vmem:[%s1 + $0x10] sm:$0xff]
    %v25 = vld [vmem:[%s1 + $0x18] sm:$0xff]
    %v26 = vld [vmem:[%s1 + $0x20] sm:$0xff]
    %v27 = vld [vmem:[%s1 + $0x28] sm:$0xff]
    %v28 = vld [vmem:[%s1 + $0x30] sm:$0xff]
    %v29 = vld [vmem:[%s1 + $0x38] sm:$0xff]
    %v30 = vld [vmem:[%s1 + $0x40] sm:$0xff]
    %v31 = vld [vmem:[%s1 + $0x48] sm:$0xff]
    %v32 = vld [vmem:[%s1 + $0x50] sm:$0xff]
    %v33 = vld [vmem:[%s1 + $0x58] sm:$0xff]
    %v34 = vld [vmem:[%s1 + $0x60] sm:$0xff]
    %v35 = vld [vmem:[%s1 + $0x68] sm:$0xff]
    %v36 = vld [vmem:[%s1 + $0x70] sm:$0xff]
    %v37 = vld [vmem:[%s1 + $0x78] sm:$0xff]
    %v38 = vld [vmem:[%s2] sm:$0xff]
    %v39 = vld [vmem:[%s2 + $0x8] sm:$0xff]
    %v40 = vld [vmem:[%s2 + $0x10] sm:$0xff]
    %v41 = vld [vmem:[%s2 + $0x18] sm:$0xff]
    %v42 = vld [vmem:[%s2 + $0x20] sm:$0xff]
    %v43 = vld [vmem:[%s2 + $0x28] sm:$0xff]
    %v44 = vld [vmem:[%s2 + $0x30] sm:$0xff]
    %v45 = vld [vmem:[%s2 + $0x38] sm:$0xff]
    %v46 = vld [vmem:[%s2 + $0x40] sm:$0xff]
    %v47 = vld [vmem:[%s2 + $0x48] sm:$0xff]
    %v48 = vld [vmem:[%s2 + $0x50] sm:$0xff]
    %v49 = vld [vmem:[%s2 + $0x58] sm:$0xff]
    %v50 = vld [vmem:[%s2 + $0x60] sm:$0xff]
    %v51 = vld [vmem:[%s2 + $0x68] sm:$0xff]
    %v52 = vld [vmem:[%s2 + $0x70] sm:$0xff]
    %v53 = vld [vmem:[%s2 + $0x78] sm:$0xff]
    %55 = vset.pattern.permute.xlu0 0
    %56 = vperm.xlu0 %55, %v38
    %v57 = vpop.permute.xlu0 %56
    %60 = vset.pattern.permute.xlu0 0
    %61 = vperm.xlu0 %60, %v39
    %v62 = vpop.permute.xlu0 %61
    %65 = vset.pattern.permute.xlu0 0
    %66 = vperm.xlu0 %65, %v40
    %v67 = vpop.permute.xlu0 %66
    %70 = vset.pattern.permute.xlu0 0
    %71 = vperm.xlu0 %70, %v41
    %v72 = vpop.permute.xlu0 %71
    %75 = vset.pattern.permute.xlu0 0
    %76 = vperm.xlu0 %75, %v42
    %v77 = vpop.permute.xlu0 %76
    %80 = vset.pattern.permute.xlu0 0
    %81 = vperm.xlu0 %80, %v43
    %v82 = vpop.permute.xlu0 %81
    %85 = vset.pattern.permute.xlu0 0
    %86 = vperm.xlu0 %85, %v44
    %v87 = vpop.permute.xlu0 %86
    %90 = vset.pattern.permute.xlu0 0
    %91 = vperm.xlu0 %90, %v45
    %v92 = vpop.permute.xlu0 %91
    %95 = vset.pattern.permute.xlu0 0
    %96 = vperm.xlu0 %95, %v46
    %v97 = vpop.permute.xlu0 %96
    %100 = vset.pattern.permute.xlu0 0
    %101 = vperm.xlu0 %100, %v47
    %v102 = vpop.permute.xlu0 %101
    %105 = vset.pattern.permute.xlu0 0
    %106 = vperm.xlu0 %105, %v48
    %v107 = vpop.permute.xlu0 %106
    %110 = vset.pattern.permute.xlu0 0
    %111 = vperm.xlu0 %110, %v49
    %v112 = vpop.permute.xlu0 %111
    %115 = vset.pattern.permute.xlu0 0
    %116 = vperm.xlu0 %115, %v50
    %v117 = vpop.permute.xlu0 %116
    %120 = vset.pattern.permute.xlu0 0
    %121 = vperm.xlu0 %120, %v51
    %v122 = vpop.permute.xlu0 %121
    %125 = vset.pattern.permute.xlu0 0
    %126 = vperm.xlu0 %125, %v52
    %v127 = vpop.permute.xlu0 %126
    %130 = vset.pattern.permute.xlu0 0
    %131 = vperm.xlu0 %130, %v53
    %v132 = vpop.permute.xlu0 %131
    %vm134 = vcmask 64512
    %v136 = vsel %vm134, %v22, 0
    %v139 = vsel %vm134, %v23, 0
    %v142 = vsel %vm134, %v24, 0
    %v145 = vsel %vm134, %v25, 0
    %v148 = vsel %vm134, %v26, 0
    %v151 = vsel %vm134, %v27, 0
    %v154 = vsel %vm134, %v28, 0
    %v157 = vsel %vm134, %v29, 0
    %v160 = vsel %vm134, %v30, 0
    %v163 = vsel %vm134, %v31, 0
    %v166 = vsel %vm134, %v32, 0
    %v169 = vsel %vm134, %v33, 0
    %v172 = vsel %vm134, %v34, 0
    %v175 = vsel %vm134, %v35, 0
    %v178 = vsel %vm134, %v36, 0
    %v181 = vsel %vm134, %v37, 0
    %183 = vmatprep.subr.mxu0 0.0
    %184 = vmatpush1.msra.mxu0 %v21
    %185 = vmatprep.subr.mxu0 0.0
    %186 = vmatpush1.msra.mxu0 0.0
    %187 = vmatprep.subr.mxu0 0.0
    %188 = vmatpush1.msra.mxu0 0.0
    %189 = vmatprep.subr.mxu0 0.0
    %190 = vmatpush1.msra.mxu0 0.0
    %191 = vmatprep.subr.mxu0 0.0
    %192 = vmatpush1.msra.mxu0 0.0
    %193 = vmatprep.subr.mxu0 0.0
    %194 = vmatpush1.msra.mxu0 0.0
    %195 = vmatprep.subr.mxu0 0.0
    %196 = vmatpush1.msra.mxu0 0.0
    %197 = vmatprep.subr.mxu0 0.0
    %198 = vmatpush1.msra.mxu0 0.0
    %199 = vmatprep.subr.mxu0 0.0
    %200 = vmatpush1.msra.mxu0 0.0
    %201 = vmatprep.subr.mxu0 0.0
    %202 = vmatpush1.msra.mxu0 0.0
    %203 = vmatprep.subr.mxu0 0.0
    %204 = vmatpush1.msra.mxu0 0.0
    %205 = vmatprep.subr.mxu0 0.0
    %206 = vmatpush1.msra.mxu0 0.0
    %207 = vmatprep.subr.mxu0 0.0
    %208 = vmatpush1.msra.mxu0 0.0
    %209 = vmatprep.subr.mxu0 0.0
    %210 = vmatpush1.msra.mxu0 0.0
    %211 = vmatprep.subr.mxu0 0.0
    %212 = vmatpush1.msra.mxu0 0.0
    %213 = vmatprep.subr.mxu0 0.0
    %214 = vmatpush1.msra.mxu0 0.0
    %215 = vmatprep.subr.mxu0 0.0
    %216 = vmatpush1.msra.mxu0 0.0
    %217 = vmatprep.subr.mxu0 0.0
    %218 = vmatpush1.msra.mxu0 0.0
    %219 = vmatprep.subr.mxu0 0.0
    %220 = vmatpush1.msra.mxu0 0.0
    %221 = vmatprep.subr.mxu0 0.0
    %222 = vmatpush1.msra.mxu0 0.0
    %223 = vmatprep.subr.mxu0 0.0
    %224 = vmatpush1.msra.mxu0 0.0
    %225 = vmatprep.subr.mxu0 0.0
    %226 = vmatpush1.msra.mxu0 0.0
    %227 = vmatprep.subr.mxu0 0.0
    %228 = vmatpush1.msra.mxu0 0.0
    %229 = vmatprep.subr.mxu0 0.0
    %230 = vmatpush1.msra.mxu0 0.0
    %231 = vmatprep.subr.mxu0 0.0
    %232 = vmatpush1.msra.mxu0 0.0
    %233 = vmatprep.subr.mxu0 0.0
    %234 = vmatpush1.msra.mxu0 0.0
    %235 = vmatprep.subr.mxu0 0.0
    %236 = vmatpush1.msra.mxu0 0.0
    %237 = vmatprep.subr.mxu0 0.0
    %238 = vmatpush1.msra.mxu0 0.0
    %239 = vmatprep.subr.mxu0 0.0
    %240 = vmatpush1.msra.mxu0 0.0
    %241 = vmatprep.subr.mxu0 0.0
    %242 = vmatpush1.msra.mxu0 0.0
    %243 = vmatprep.subr.mxu0 0.0
    %244 = vmatpush1.msra.mxu0 0.0
    %245 = vmatprep.subr.mxu0 0.0
    %246 = vmatpush1.msra.mxu0 0.0
    %247 = vmatprep.mubr.f32.mxu0 0.0
    %248 = vmatmul.mubr.f32.gmra.mrb[0].mxu0 %v136
    %v249 = vpop.f32.mrb[0].mxu0
    %v250 = vadd.f32 %v57, %v249
    %v251 = vpop.f32.mrb[0].mxu0
    %252 = vmatprep.mubr.f32.mxu0 0.0
    %253 = vmatmul.mubr.f32.gmra.mrb[0].mxu0 %v139
    %v254 = vpop.f32.mrb[0].mxu0
    %v255 = vadd.f32 %v62, %v254
    %v256 = vpop.f32.mrb[0].mxu0
    %257 = vmatprep.mubr.f32.mxu0 0.0
    %258 = vmatmul.mubr.f32.gmra.mrb[0].mxu0 %v142
    %v259 = vpop.f32.mrb[0].mxu0
    %v260 = vadd.f32 %v67, %v259
    %v261 = vpop.f32.mrb[0].mxu0
    %262 = vmatprep.mubr.f32.mxu0 0.0
    %263 = vmatmul.mubr.f32.gmra.mrb[0].mxu0 %v145
    %v264 = vpop.f32.mrb[0].mxu0
    %v265 = vadd.f32 %v72, %v264
    %v266 = vpop.f32.mrb[0].mxu0
    %267 = vmatprep.mubr.f32.mxu0 0.0
    %268 = vmatmul.mubr.f32.gmra.mrb[0].mxu0 %v148
    %v269 = vpop.f32.mrb[0].mxu0
    %v270 = vadd.f32 %v77, %v269
    %v271 = vpop.f32.mrb[0].mxu0
    %272 = vmatprep.mubr.f32.mxu0 0.0
    %273 = vmatmul.mubr.f32.gmra.mrb[0].mxu0 %v151
    %v274 = vpop.f32.mrb[0].mxu0
    %v275 = vadd.f32 %v82, %v274
    %v276 = vpop.f32.mrb[0].mxu0
    %277 = vmatprep.mubr.f32.mxu0 0.0
    %278 = vmatmul.mubr.f32.gmra.mrb[0].mxu0 %v154
    %v279 = vpop.f32.mrb[0].mxu0
    %v280 = vadd.f32 %v87, %v279
    %v281 = vpop.f32.mrb[0].mxu0
    %282 = vmatprep.mubr.f32.mxu0 0.0
    %283 = vmatmul.mubr.f32.gmra.mrb[0].mxu0 %v157
    %v284 = vpop.f32.mrb[0].mxu0
    %v285 = vadd.f32 %v92, %v284
    %v286 = vpop.f32.mrb[0].mxu0
    %287 = vmatprep.mubr.f32.mxu0 0.0
    %288 = vmatmul.mubr.f32.gmra.mrb[0].mxu0 %v160
    %v289 = vpop.f32.mrb[0].mxu0
    %v290 = vadd.f32 %v97, %v289
    %v291 = vpop.f32.mrb[0].mxu0
    %292 = vmatprep.mubr.f32.mxu0 0.0
    %293 = vmatmul.mubr.f32.gmra.mrb[0].mxu0 %v163
    %v294 = vpop.f32.mrb[0].mxu0
    %v295 = vadd.f32 %v102, %v294
    %v296 = vpop.f32.mrb[0].mxu0
    %297 = vmatprep.mubr.f32.mxu0 0.0
    %298 = vmatmul.mubr.f32.gmra.mrb[0].mxu0 %v166
    %v299 = vpop.f32.mrb[0].mxu0
    %v300 = vadd.f32 %v107, %v299
    %v301 = vpop.f32.mrb[0].mxu0
    %302 = vmatprep.mubr.f32.mxu0 0.0
    %303 = vmatmul.mubr.f32.gmra.mrb[0].mxu0 %v169
    %v304 = vpop.f32.mrb[0].mxu0
    %v305 = vadd.f32 %v112, %v304
    %v306 = vpop.f32.mrb[0].mxu0
    %307 = vmatprep.mubr.f32.mxu0 0.0
    %308 = vmatmul.mubr.f32.gmra.mrb[0].mxu0 %v172
    %v309 = vpop.f32.mrb[0].mxu0
    %v310 = vadd.f32 %v117, %v309
    %v311 = vpop.f32.mrb[0].mxu0
    %312 = vmatprep.mubr.f32.mxu0 0.0
    %313 = vmatmul.mubr.f32.gmra.mrb[0].mxu0 %v175
    %v314 = vpop.f32.mrb[0].mxu0
    %v315 = vadd.f32 %v122, %v314
    %v316 = vpop.f32.mrb[0].mxu0
    %317 = vmatprep.mubr.f32.mxu0 0.0
    %318 = vmatmul.mubr.f32.gmra.mrb[0].mxu0 %v178
    %v319 = vpop.f32.mrb[0].mxu0
    %v320 = vadd.f32 %v127, %v319
    %v321 = vpop.f32.mrb[0].mxu0
    %322 = vmatprep.mubr.f32.mxu0 0.0
    %323 = vmatmul.mubr.f32.gmra.mrb[0].mxu0 %v181
    %v324 = vpop.f32.mrb[0].mxu0
    %v325 = vadd.f32 %v132, %v324
    %v326 = vpop.f32.mrb[0].mxu0
    %327 = vdwg.mxu0
    %v328 = vtanh.pop %v250
    %v329 = vtanh.pop %v255
    %v330 = vtanh.pop %v260
    %v331 = vtanh.pop %v265
    %v332 = vtanh.pop %v270
    %v333 = vtanh.pop %v275
    %v334 = vtanh.pop %v280
    %v335 = vtanh.pop %v285
    %v336 = vtanh.pop %v290
    %v337 = vtanh.pop %v295
    %v338 = vtanh.pop %v300
    %v339 = vtanh.pop %v305
    %v340 = vtanh.pop %v310
    %v341 = vtanh.pop %v315
    %v342 = vtanh.pop %v320
    %v343 = vtanh.pop %v325
    %v344 = vld [vmem:[%s3] sm:$0xff]
    %v345 = vld [vmem:[%s4] sm:$0xff]
    %347 = vset.pattern.permute.xlu0 0
    %348 = vperm.xlu0 %347, %v345
    %v349 = vpop.permute.xlu0 %348
    %351 = vmatprep.subr.mxu0 0.0
    %352 = vmatpush1.msra.mxu0 %v328
    %353 = vmatprep.subr.mxu0 0.0
    %354 = vmatpush1.msra.mxu0 %v329
    %355 = vmatprep.subr.mxu0 0.0
    %356 = vmatpush1.msra.mxu0 %v330
    %357 = vmatprep.subr.mxu0 0.0
    %358 = vmatpush1.msra.mxu0 %v331
    %359 = vmatprep.subr.mxu0 0.0
    %360 = vmatpush1.msra.mxu0 %v332
    %361 = vmatprep.subr.mxu0 0.0
    %362 = vmatpush1.msra.mxu0 %v333
    %363 = vmatprep.subr.mxu0 0.0
    %364 = vmatpush1.msra.mxu0 %v334
    %365 = vmatprep.subr.mxu0 0.0
    %366 = vmatpush1.msra.mxu0 %v335
    %367 = vmatprep.subr.mxu0 0.0
    %368 = vmatpush1.msra.mxu0 %v336
    %369 = vmatprep.subr.mxu0 0.0
    %370 = vmatpush1.msra.mxu0 %v337
    %371 = vmatprep.subr.mxu0 0.0
    %372 = vmatpush1.msra.mxu0 %v338
    %373 = vmatprep.subr.mxu0 0.0
    %374 = vmatpush1.msra.mxu0 %v339
    %375 = vmatprep.subr.mxu0 0.0
    %376 = vmatpush1.msra.mxu0 %v340
    %377 = vmatprep.subr.mxu0 0.0
    %378 = vmatpush1.msra.mxu0 %v341
    %379 = vmatprep.subr.mxu0 0.0
    %380 = vmatpush1.msra.mxu0 %v342
    %381 = vmatprep.subr.mxu0 0.0
    %382 = vmatpush1.msra.mxu0 %v343
    %383 = vmatprep.subr.mxu0 0.0
    %384 = vmatpush1.msra.mxu0 0.0
    %385 = vmatprep.subr.mxu0 0.0
    %386 = vmatpush1.msra.mxu0 0.0
    %387 = vmatprep.subr.mxu0 0.0
    %388 = vmatpush1.msra.mxu0 0.0
    %389 = vmatprep.subr.mxu0 0.0
    %390 = vmatpush1.msra.mxu0 0.0
    %391 = vmatprep.subr.mxu0 0.0
    %392 = vmatpush1.msra.mxu0 0.0
    %393 = vmatprep.subr.mxu0 0.0
    %394 = vmatpush1.msra.mxu0 0.0
    %395 = vmatprep.subr.mxu0 0.0
    %396 = vmatpush1.msra.mxu0 0.0
    %397 = vmatprep.subr.mxu0 0.0
    %398 = vmatpush1.msra.mxu0 0.0
    %399 = vmatprep.subr.mxu0 0.0
    %400 = vmatpush1.msra.mxu0 0.0
    %401 = vmatprep.subr.mxu0 0.0
    %402 = vmatpush1.msra.mxu0 0.0
    %403 = vmatprep.subr.mxu0 0.0
    %404 = vmatpush1.msra.mxu0 0.0
    %405 = vmatprep.subr.mxu0 0.0
    %406 = vmatpush1.msra.mxu0 0.0
    %407 = vmatprep.subr.mxu0 0.0
    %408 = vmatpush1.msra.mxu0 0.0
    %409 = vmatprep.subr.mxu0 0.0
    %410 = vmatpush1.msra.mxu0 0.0
    %411 = vmatprep.subr.mxu0 0.0
    %412 = vmatpush1.msra.mxu0 0.0
    %413 = vmatprep.subr.mxu0 0.0
    %414 = vmatpush1.msra.mxu0 0.0
    %415 = vmatprep.mubr.f32.mxu0 0.0
    %416 = vmatmul.mubr.f32.gmra.mrb[0].mxu0 %v344
    %v417 = vpop.f32.mrb[0].mxu0
    %v418 = vadd.f32 %v349, %v417
    %v419 = vpop.f32.mrb[0].mxu0
    %420 = vdwg.mxu0
    %v421 = vlaneseq
    %v422 = vshrl.u32 %v421, 7
    %vm423 = vcmp.lt.s32.totalorder %v422, 3
    %v424 = vsel %vm423, %v418, -inf
    %v425 = vrot.slane %v424, 4
    %v426 = vmax.f32 %v424, %v425
    %v427 = vrot.slane %v426, 2
    %v428 = vmax.f32 %v426, %v427
    %v429 = vrot.slane %v428, 1
    %v430 = vmax.f32 %v428, %v429
    %v431 = vsub.f32 %v424, %v430
    %v432 = vmul.f32 %v431, 1.442695
    %v433 = vpow.pop %v432
    %v434 = vrot.slane %v433, 4
    %v435 = vadd.f32 %v433, %v434
    %v436 = vrot.slane %v435, 2
    %v437 = vadd.f32 %v435, %v436
    %v438 = vrot.slane %v437, 1
    %v439 = vadd.f32 %v437, %v438
    %v440 = vrcp.pop %v439
    %v441 = vmul.f32 %v433, %v440
    %442 = vst [vmem:[#allocation2] sm:$0xff] %v441
    // Predicated region
    $region22: #{tpu_custom_call.1} parent=1 // pred_check
      _
    $region23: #{tpu_custom_call.1} parent=1 // pred_check_branch
      %444 = sbr.rel (0) target = $region25
    $region24: #{tpu_custom_call.1} parent=1 // pred_region
      %s446 = ssub.s32 128, 128
      %447 = vsyncadd [#allocation3], %s446
      %s449 = sshll.u32 [#allocation2], 4
      %s450 = int_to_ptr.vmem [resolvable:$true] %s449
      %452 = dma.vmem_to_hbm [thread:$0]  %s450, 128, %s5, [#allocation3]
    $region25: #{tpu_custom_call.1} parent=1 // pred_fallthru
      _
    // Predicated region
    $region26: #{tpu_custom_call.1} parent=1 // pred_check
      _
    $region27: #{tpu_custom_call.1} parent=1 // pred_check_branch
      %454 = sbr.rel (0) target = $region29
    $region28: #{tpu_custom_call.1} parent=1 // pred_region
      %455 = dma.done [#allocation3], 128
    $region29: #{tpu_custom_call.1} parent=1 // pred_fallthru
      _
    %456 = vsyncpa [#allocation3], 1

</llo_original>
